<compile_context>
chip_gen: v6e
topology: v6e:2x2x1
jax: 0.10.0
libtpu: 0.0.40
codegen_flags: <defaults>
</compile_context>

<pallas_src>
import jax
import jax.numpy as jnp
from jax.experimental import pallas as pl
from jax.experimental.pallas import tpu as pltpu

_MiB = 1024 * 1024


def _copy_kernel(x_ref, o_ref):
    # Pure DMA-through copy: the chomp is expressed by the grid/BlockSpecs.
    o_ref[...] = x_ref[...]


def _round_up(x: int, m: int) -> int:
    return ((x + m - 1) // m) * m


def _cdiv(a: int, b: int) -> int:
    return -(-a // b)


def _vmem_buffer_budget_bytes() -> int:
    """Budget for the double-buffered (in + out) working set: 4 * tr * tl * itemsize."""
    try:
        cap = int(getattr(pltpu.get_tpu_info(), "vmem_capacity_bytes", 64 * _MiB))
    except Exception:  # query unavailable -> conservative (v7x per-TC physical) default
        cap = 64 * _MiB
    # ~3/8 of physical VMEM for pipeline buffers, capped at 48 MiB:
    #   v5e/v6e (128 MiB VMEM) -> 48 MiB of buffers (12 MiB tiles)
    #   v7x      (64 MiB VMEM) -> 24 MiB of buffers ( 6 MiB tiles)
    # leaves headroom for compiler scratch on every generation.
    return min((cap * 3) // 8, 48 * _MiB)


def _select_tiles(rows: int, l_out: int, itemsize: int, budget: int):
    """Pick (tr, tl): sublane/lane-aligned tiles for the (rows, l_out) copy."""
    sublane = max(8, 32 // max(itemsize, 1))   # f32 -> 8, bf16 -> 16, int8/fp8 -> 32
    rows_p = _round_up(rows, sublane)
    lout_p = _round_up(l_out, 128)

    # Preferred: a single lane block covering the whole (chomped) time axis.
    tl = lout_p
    max_tr = budget // (4 * tl * itemsize)
    if max_tr >= sublane:
        tr = min(rows_p, (max_tr // sublane) * sublane)
    else:
        # Very long L: lane-tile, giving the remaining budget to the row axis.
        tl = min(lout_p, 2048)
        while tl > 128 and budget // (4 * tl * itemsize) < sublane:
            tl //= 2
        tr = max(sublane,
                 min(rows_p, ((budget // (4 * tl * itemsize)) // sublane) * sublane))

    # Megacore (v7x has 2 TensorCores): guarantee >= 2 blocks along a "parallel"
    # axis so both cores issue DMA. Only the row axis can split cheaply here.
    if _cdiv(rows_p, tr) * _cdiv(lout_p, tl) < 2 and rows_p >= 2 * sublane:
        tr = _round_up(_cdiv(rows_p, 2), sublane)

    return tr, tl


def chomp1d(x: jax.Array, chomp_size: int) -> jax.Array:
    """Pallas equivalent of Chomp1d(chomp_size)(x) for x of shape (N, C, L)."""
    n, c, l = x.shape
    if chomp_size == 0:
        # Degenerate TCN layer (kernel_size=1 / padding=0): identity pass-through.
        return x
    assert 0 < chomp_size < l, "chomp_size must be in [0, L)"
    l_out = l - chomp_size

    rows = n * c
    x2 = x.reshape(rows, l)                 # contiguous row-major reshape: free

    itemsize = jnp.dtype(x.dtype).itemsize
    budget = _vmem_buffer_budget_bytes()
    tr, tl = _select_tiles(rows, l_out, itemsize, budget)

    grid = (_cdiv(rows, tr), _cdiv(l_out, tl))

    # Double-buffered in + out footprint, plus headroom for compiler scratch.
    footprint = 4 * tr * tl * itemsize
    vmem_limit = min(max(footprint + 2 * _MiB, 16 * _MiB), 56 * _MiB)

    out2 = pl.pallas_call(
        _copy_kernel,
        out_shape=jax.ShapeDtypeStruct((rows, l_out), x.dtype),
        grid=grid,
        # Input and output share block indices; since the grid only spans the
        # first l_out columns, the chomped tail columns are never DMA'd in.
        # Boundary blocks (rows % tr != 0, l_out % tl != 0, or reads past L on
        # the last lane block) are handled by Pallas: OOB reads are padded and
        # OOB writes are masked; the padded region is never written.
        in_specs=[pl.BlockSpec((tr, tl), lambda i, j: (i, j))],
        out_specs=pl.BlockSpec((tr, tl), lambda i, j: (i, j)),
        compiler_params=pltpu.CompilerParams(
            dimension_semantics=("parallel", "parallel"),
            vmem_limit_bytes=vmem_limit,
        ),
    )(x2)

    return out2.reshape(n, c, l_out)


if __name__ == "__main__":
    key = jax.random.PRNGKey(0)

    # 1) Small shape consistent with a Conv1d output: (batch, channels, length).
    N, C, L = 2, 4, 16
    chomp_size = 3
    x = jax.random.normal(key, (N, C, L), dtype=jnp.float32)
    out = jax.block_until_ready(chomp1d(x, chomp_size))
    ref = x[:, :, :-chomp_size]
    assert out.shape == (N, C, L - chomp_size), out.shape
    assert out.dtype == x.dtype
    assert jnp.array_equal(out, ref), "Pallas Chomp1d mismatch vs reference (f32)"

    # 2) bf16, non-128-aligned l_out: exercises packed sublanes + masked tail.
    x2 = jax.random.normal(jax.random.PRNGKey(1), (3, 5, 200), dtype=jnp.bfloat16)
    out2 = jax.block_until_ready(chomp1d(x2, 7))
    ref2 = x2[:, :, :-7]
    assert out2.shape == ref2.shape and out2.dtype == x2.dtype
    assert jnp.array_equal(out2, ref2), "Pallas Chomp1d mismatch vs reference (bf16)"

    # 3) Enough rows to trigger the >=2-block megacore split (grid (2, 1)).
    x3 = jax.random.normal(jax.random.PRNGKey(2), (2, 16, 300), dtype=jnp.float32)
    out3 = jax.block_until_ready(chomp1d(x3, 5))
    ref3 = x3[:, :, :-5]
    assert out3.shape == ref3.shape
    assert jnp.array_equal(out3, ref3), "Pallas Chomp1d mismatch vs reference (split)"

    # 4) chomp_size == 0: identity pass-through (real TCN kernel_size=1 layers).
    out4 = jax.block_until_ready(chomp1d(x, 0))
    assert jnp.array_equal(out4, x), "chomp_size=0 should be identity"

    print("KERNEL_OK")
</pallas_src>

<mosaic_0001>
module attributes {stable_mosaic.version = 11 : i64} {
  func.func @_copy_kernel(%arg0: i32, %arg1: i32, %arg2: memref<8x128xf32, #tpu.memory_space<vmem>>, %arg3: memref<8x128xf32, #tpu.memory_space<vmem>>) attributes {dimension_semantics = [#tpu.dimension_semantics<parallel>, #tpu.dimension_semantics<parallel>], iteration_bounds = array<i64: 1, 1>, scalar_prefetch = 0 : i64, scratch_operands = 0 : i64, tpu.core_type = #tpu.core_type<tc>, window_params = [{transform_indices = @transform_0, window_bounds = array<i64: 8, 128>}, {transform_indices = @transform_1, window_bounds = array<i64: 8, 128>}]} {
    %c0 = arith.constant 0 : index
    %c0_0 = arith.constant 0 : index
    %0 = vector.load %arg2[%c0, %c0_0] : memref<8x128xf32, #tpu.memory_space<vmem>>, vector<8x128xf32>
    %c0_1 = arith.constant 0 : index
    %c0_2 = arith.constant 0 : index
    %1 = vector.load %arg3[%c0_1, %c0_2] : memref<8x128xf32, #tpu.memory_space<vmem>>, vector<8x128xf32>
    tpu.vector_store %arg3[%c0_1, %c0_2], %0 {strides = array<i32>} : memref<8x128xf32, #tpu.memory_space<vmem>>, vector<8x128xf32>,
    return
  }
  func.func @transform_0(%arg0: i32, %arg1: i32) -> (i32, i32) {
    %c0_i32 = arith.constant 0 : i32
    return %arg0, %arg1 : i32, i32
  }
  func.func @transform_1(%arg0: i32, %arg1: i32) -> (i32, i32) {
    %c0_i32 = arith.constant 0 : i32
    return %arg0, %arg1 : i32, i32
  }
}

</mosaic_0001>

<llo_original>
// kernel: tpu_custom_call.1
$region0: #{tpu_custom_call.1}
  #allocation0 [shape = 'u32[]', space=smem, size = 0x4, offset = 0x4, fixed_abs, tag = 'smem constant byte address 0x4 - core index']
  #allocation1 [shape = 'u32[144,128]{1,0:T(1,128)}', space=vmem, size = 0x12000, scoped, tag = 'internal scratch']
  %s0 = inlined_call_operand.hbm [shape: f32[8,16], index: 0, kind: input, shape index: {}]
  %s1 = inlined_call_operand.hbm [shape: f32[8,13], index: 1, kind: output, shape index: {}]
  %s2 = sld [smem:[#allocation0]]
  $region18: #{tpu_custom_call.1} parent=0
    _
  %s4 = ssub.s32 1, %s2
  %s5 = scalar_select 0, %s4, %s2
  $region1: #{tpu_custom_call.1} parent=0
    #allocation2 [shape = 'u8[4096]{0}', space=vmem, size = 0x1000, scoped, tag = 'input window, operand 0, single buffered']
    #allocation3 [shape = 's32[1]{0}', space=sflag, size = 0x4, scoped, tag = 'scoped memory for tpu_custom_call.1']
    #allocation4 [shape = 's32[1]{0}', space=sflag, size = 0x4, scoped, tag = 'scoped memory for tpu_custom_call.1']
    #allocation5 [shape = 'u8[4096]{0}', space=vmem, size = 0x1000, scoped, tag = 'output window, operand 0, single buffered']
    %6 = vsyncpa [#allocation3], 0
    %7 = vsyncpa [#allocation4], 0
    // Predicated region
    $region2: #{tpu_custom_call.1} parent=1 // pred_check
      _
    $region3: #{tpu_custom_call.1} parent=1 // pred_check_branch
      %9 = sbr.rel (0) target = $region5
    $region4: #{tpu_custom_call.1} parent=1 // pred_region
      %s11 = ssub.s32 128, 128
      %12 = vsyncadd [#allocation3], %s11
      %s14 = sshll.u32 [#allocation2], 4
      %s15 = int_to_ptr.vmem [resolvable:$true] %s14
      %17 = dma.hbm_to_vmem [thread:$0]  %s0, 128, %s15, [#allocation3]
    $region5: #{tpu_custom_call.1} parent=1 // pred_fallthru
      _
    // Predicated region
    $region6: #{tpu_custom_call.1} parent=1 // pred_check
      _
    $region7: #{tpu_custom_call.1} parent=1 // pred_check_branch
      %19 = sbr.rel (0) target = $region9
    $region8: #{tpu_custom_call.1} parent=1 // pred_region
      %20 = dma.done [#allocation3], 128
    $region9: #{tpu_custom_call.1} parent=1 // pred_fallthru
      _
    %v21 = vld [vmem:[#allocation2] sm:$0xff]
    %22 = vst [vmem:[#allocation5] sm:$0xff] %v21
    // Predicated region
    $region10: #{tpu_custom_call.1} parent=1 // pred_check
      _
    $region11: #{tpu_custom_call.1} parent=1 // pred_check_branch
      %24 = sbr.rel (0) target = $region13
    $region12: #{tpu_custom_call.1} parent=1 // pred_region
      %s26 = ssub.s32 128, 128
      %27 = vsyncadd [#allocation4], %s26
      %s29 = sshll.u32 [#allocation5], 4
      %s30 = int_to_ptr.vmem [resolvable:$true] %s29
      %32 = dma.vmem_to_hbm [thread:$0]  %s30, 128, %s1, [#allocation4]
    $region13: #{tpu_custom_call.1} parent=1 // pred_fallthru
      _
    // Predicated region
    $region14: #{tpu_custom_call.1} parent=1 // pred_check
      _
    $region15: #{tpu_custom_call.1} parent=1 // pred_check_branch
      %34 = sbr.rel (0) target = $region17
    $region16: #{tpu_custom_call.1} parent=1 // pred_region
      %35 = dma.done [#allocation4], 128
    $region17: #{tpu_custom_call.1} parent=1 // pred_fallthru
      _
    %36 = vsyncpa [#allocation3], 1
    %37 = vsyncpa [#allocation4], 1

</llo_original>
